<compile_context>
chip_gen: v6e
topology: v6e:2x2x1
jax: 0.10.0
libtpu: 0.0.40
codegen_flags: <defaults>
</compile_context>

<pallas_src>
import functools

import jax
import jax.numpy as jnp
from jax.experimental import pallas as pl
from jax.experimental.pallas import tpu as pltpu


def _layernorm_kernel(*refs, eps: float, use_scale: bool, use_center: bool,
                      inv_nm1: float):
    # refs layout: x_ref, [scale_ref], [center_ref], o_ref  (params optional)
    idx = 0
    x_ref = refs[idx]; idx += 1
    scale_ref = None
    center_ref = None
    if use_scale:
        scale_ref = refs[idx]; idx += 1
    if use_center:
        center_ref = refs[idx]; idx += 1
    o_ref = refs[idx]

    x = x_ref[...].astype(jnp.float32)                      # [TB, F]

    mean = jnp.mean(x, axis=-1, keepdims=True)              # [TB, 1] (XLU reduce)
    diff = x - mean
    # torch.std uses Bessel's correction (ddof=1); fold 1/(n-1) into a
    # compile-time constant multiply instead of a divide.
    var = jnp.sum(diff * diff, axis=-1, keepdims=True) * jnp.float32(inv_nm1)
    std = jnp.sqrt(var)

    denom = std + jnp.float32(eps)
    inv = pl.reciprocal(denom, approx=True)                 # EUP slot (approx)
    inv = inv * (jnp.float32(2.0) - denom * inv)            # 1 Newton step -> ~f32 exact
    out = diff * inv                                        # [TB, F]

    if use_scale:
        out = out * scale_ref[...].astype(jnp.float32)      # [1, F] broadcast
    if use_center:
        out = out + center_ref[...].astype(jnp.float32)     # [1, F] broadcast

    o_ref[...] = out.astype(o_ref.dtype)


def _pick_batch_tile(B: int, F: int, itemsize: int) -> int:
    """Largest sublane-aligned batch tile whose double-buffered in+out blocks
    stay under ~8 MiB (safe within v5e's 16 MiB default scoped VMEM, v6e's
    32 MiB default, and v7x's 64 MiB physical VMEM)."""
    budget = 8 * 1024 * 1024
    tb = budget // (4 * F * itemsize)          # 2 bufs x (in + out) x TB x F
    tb = max(8, min(tb, 4096))
    if tb >= B:
        return B                               # whole batch in a single block
    return (tb // 8) * 8                       # sublane-aligned tile


def layer_norm(x, scale_param=None, center_param=None, *,
               eps: float = 1e-6, center: bool = True, scale: bool = False):
    """x: [B, F]. scale_param / center_param: [F] (only required when the
    corresponding flag is set, matching the nn.Module)."""
    B, F = x.shape
    assert F > 1, "unbiased std (ddof=1) is undefined for a single feature"

    TB = _pick_batch_tile(B, F, x.dtype.itemsize)
    grid_b = pl.cdiv(B, TB)

    args = [x]
    in_specs = [pl.BlockSpec((TB, F), lambda i: (i, 0))]        # x tile
    if scale:
        assert scale_param is not None
        args.append(scale_param.reshape(1, F))
        in_specs.append(pl.BlockSpec((1, F), lambda i: (0, 0)))  # scale_param
    if center:
        assert center_param is not None
        args.append(center_param.reshape(1, F))
        in_specs.append(pl.BlockSpec((1, F), lambda i: (0, 0)))  # center_param

    kernel = functools.partial(
        _layernorm_kernel, eps=eps, use_scale=scale, use_center=center,
        inv_nm1=1.0 / (F - 1))

    return pl.pallas_call(
        kernel,
        out_shape=jax.ShapeDtypeStruct((B, F), x.dtype),
        grid_spec=pltpu.PrefetchScalarGridSpec(
            num_scalar_prefetch=0,
            grid=(grid_b,),
            in_specs=in_specs,
            out_specs=pl.BlockSpec((TB, F), lambda i: (i, 0)),
        ),
        compiler_params=pltpu.CompilerParams(
            # rows are independent -> shard grid across TCs on v7x megacore
            dimension_semantics=("parallel",)),
    )(*args)


def layer_norm_ref(x, scale_param=None, center_param=None, *,
                   eps=1e-6, center=True, scale=False):
    """Pure-JAX reference mirroring the PyTorch forward."""
    mean = jnp.mean(x, axis=-1, keepdims=True)
    std = jnp.std(x, axis=-1, keepdims=True, ddof=1)       # unbiased, like torch
    out = (x - mean) / (std + eps)
    if scale:
        out = out * scale_param
    if center:
        out = out + center_param
    return out


if __name__ == "__main__":
    key = jax.random.PRNGKey(0)
    k_x, k_s, k_c = jax.random.split(key, 3)

    batch, features = 8, 32                                # small 1D LayerNorm
    x = jax.random.normal(k_x, (batch, features), dtype=jnp.float32)

    # --- Test 1: module defaults (center=True, scale=False; init values) ---
    center_param = jnp.zeros((features,), dtype=jnp.float32)
    out = layer_norm(x, center_param=center_param,
                     eps=1e-6, center=True, scale=False)
    out = jax.block_until_ready(out)
    ref = layer_norm_ref(x, center_param=center_param,
                         eps=1e-6, center=True, scale=False)
    assert out.shape == (batch, features)
    assert jnp.allclose(out, ref, atol=1e-5, rtol=1e-5), "mismatch (default cfg)"

    # --- Test 2: scale=True, center=True with non-trivial params ---
    scale_param = 1.0 + 0.1 * jax.random.normal(k_s, (features,), jnp.float32)
    center_param2 = 0.1 * jax.random.normal(k_c, (features,), jnp.float32)
    out2 = layer_norm(x, scale_param=scale_param, center_param=center_param2,
                      eps=1e-6, center=True, scale=True)
    out2 = jax.block_until_ready(out2)
    ref2 = layer_norm_ref(x, scale_param=scale_param, center_param=center_param2,
                          eps=1e-6, center=True, scale=True)
    assert jnp.allclose(out2, ref2, atol=1e-5, rtol=1e-5), "mismatch (scale cfg)"

    print("KERNEL_OK")
</pallas_src>

<mosaic_0001>
module attributes {stable_mosaic.version = 11 : i64} {
  func.func @_layernorm_kernel(%arg0: i32, %arg1: memref<8x32xf32, #tpu.memory_space<vmem>>, %arg2: memref<1x32xf32, #tpu.memory_space<vmem>>, %arg3: memref<8x32xf32, #tpu.memory_space<vmem>>) attributes {dimension_semantics = [#tpu.dimension_semantics<parallel>], iteration_bounds = array<i64: 1>, scalar_prefetch = 0 : i64, scratch_operands = 0 : i64, tpu.core_type = #tpu.core_type<tc>, window_params = [{transform_indices = @transform_0, window_bounds = array<i64: 8, 32>}, {pipeline_mode = #tpu.pipeline_mode<synchronous>, transform_indices = @transform_1, window_bounds = array<i64: 1, 32>}, {transform_indices = @transform_2, window_bounds = array<i64: 8, 32>}]} {
    %c0 = arith.constant 0 : index
    %c0_0 = arith.constant 0 : index
    %0 = vector.load %arg1[%c0, %c0_0] : memref<8x32xf32, #tpu.memory_space<vmem>>, vector<8x32xf32>
    %cst = arith.constant dense<0.000000e+00> : vector<8xf32>
    %1 = vector.multi_reduction <add>, %0, %cst [1] : vector<8x32xf32> to vector<8xf32>
    %2 = vector.shape_cast %1 : vector<8xf32> to vector<8x1xf32>
    %cst_1 = arith.constant 3.200000e+01 : f32
    %3 = vector.broadcast %cst_1 : f32 to vector<8x1xf32>
    %4 = arith.divf %2, %3 : vector<8x1xf32>
    %5 = vector.broadcast %4 : vector<8x1xf32> to vector<8x32xf32>
    %6 = arith.subf %0, %5 : vector<8x32xf32>
    %7 = arith.mulf %6, %6 : vector<8x32xf32>
    %cst_2 = arith.constant dense<0.000000e+00> : vector<8xf32>
    %8 = vector.multi_reduction <add>, %7, %cst_2 [1] : vector<8x32xf32> to vector<8xf32>
    %9 = vector.shape_cast %8 : vector<8xf32> to vector<8x1xf32>
    %cst_3 = arith.constant 0.0322580636 : f32
    %10 = vector.broadcast %cst_3 : f32 to vector<8x1xf32>
    %11 = arith.mulf %9, %10 : vector<8x1xf32>
    %12 = math.sqrt %11 : vector<8x1xf32>
    %cst_4 = arith.constant 9.99999997E-7 : f32
    %13 = vector.broadcast %cst_4 : f32 to vector<8x1xf32>
    %14 = arith.addf %12, %13 : vector<8x1xf32>
    %15 = tpu.reciprocal %14 {approx = true} : vector<8x1xf32> -> vector<8x1xf32>
    %16 = arith.mulf %14, %15 : vector<8x1xf32>
    %cst_5 = arith.constant 2.000000e+00 : f32
    %17 = vector.broadcast %cst_5 : f32 to vector<8x1xf32>
    %18 = arith.subf %17, %16 : vector<8x1xf32>
    %19 = arith.mulf %15, %18 : vector<8x1xf32>
    %20 = vector.broadcast %19 : vector<8x1xf32> to vector<8x32xf32>
    %21 = arith.mulf %6, %20 : vector<8x32xf32>
    %c0_6 = arith.constant 0 : index
    %c0_7 = arith.constant 0 : index
    %22 = vector.load %arg2[%c0_6, %c0_7] : memref<1x32xf32, #tpu.memory_space<vmem>>, vector<1x32xf32>
    %23 = vector.broadcast %22 : vector<1x32xf32> to vector<8x32xf32>
    %24 = arith.addf %21, %23 : vector<8x32xf32>
    %c0_8 = arith.constant 0 : index
    %c0_9 = arith.constant 0 : index
    %25 = vector.load %arg3[%c0_8, %c0_9] : memref<8x32xf32, #tpu.memory_space<vmem>>, vector<8x32xf32>
    tpu.vector_store %arg3[%c0_8, %c0_9], %24 {strides = array<i32>} : memref<8x32xf32, #tpu.memory_space<vmem>>, vector<8x32xf32>,
    return
  }
  func.func @transform_0(%arg0: i32) -> (i32, i32) {
    %c0_i32 = arith.constant 0 : i32
    %c0_i32_0 = arith.constant 0 : i32
    return %arg0, %c0_i32 : i32, i32
  }
  func.func @transform_1(%arg0: i32) -> (i32, i32) {
    %c0_i32 = arith.constant 0 : i32
    %c0_i32_0 = arith.constant 0 : i32
    %c0_i32_1 = arith.constant 0 : i32
    return %c0_i32, %c0_i32_0 : i32, i32
  }
  func.func @transform_2(%arg0: i32) -> (i32, i32) {
    %c0_i32 = arith.constant 0 : i32
    %c0_i32_0 = arith.constant 0 : i32
    return %arg0, %c0_i32 : i32, i32
  }
}

</mosaic_0001>

<llo_original>
// kernel: tpu_custom_call.1
$region0: #{tpu_custom_call.1}
  #allocation0 [shape = 'u32[]', space=smem, size = 0x4, offset = 0x4, fixed_abs, tag = 'smem constant byte address 0x4 - core index']
  #allocation1 [shape = 'u32[144,128]{1,0:T(1,128)}', space=vmem, size = 0x12000, scoped, tag = 'internal scratch']
  %s0 = inlined_call_operand.hbm [shape: f32[8,32], index: 0, kind: input, shape index: {}]
  %s1 = inlined_call_operand.vmem [shape: f32[1,32], index: 1, kind: input, shape index: {}]
  %s2 = inlined_call_operand.hbm [shape: f32[8,32], index: 2, kind: output, shape index: {}]
  %s3 = sld [smem:[#allocation0]]
  $region22: #{tpu_custom_call.1} parent=0
    _
  %s5 = ssub.s32 1, %s3
  %s6 = scalar_select 0, %s5, %s3
  $region1: #{tpu_custom_call.1} parent=0
    #allocation2 [shape = 'u8[4096]{0}', space=vmem, size = 0x1000, scoped, tag = 'input window, operand 0, single buffered']
    #allocation3 [shape = 's32[1]{0}', space=sflag, size = 0x4, scoped, tag = 'scoped memory for tpu_custom_call.1']
    #allocation4 [shape = 's32[1]{0}', space=sflag, size = 0x4, scoped, tag = 'scoped memory for tpu_custom_call.1']
    #allocation5 [shape = 'u8[4096]{0}', space=vmem, size = 0x1000, scoped, tag = 'output window, operand 0, single buffered']
    %7 = vsyncpa [#allocation3], 0
    %8 = vsyncpa [#allocation4], 0
    // Predicated region
    $region2: #{tpu_custom_call.1} parent=1 // pred_check
      _
    $region3: #{tpu_custom_call.1} parent=1 // pred_check_branch
      %10 = sbr.rel (0) target = $region5
    $region4: #{tpu_custom_call.1} parent=1 // pred_region
      %s12 = ssub.s32 128, 128
      %13 = vsyncadd [#allocation3], %s12
      %s15 = sshll.u32 [#allocation2], 4
      %s16 = int_to_ptr.vmem [resolvable:$true] %s15
      %18 = dma.hbm_to_vmem [thread:$0]  %s0, 128, %s16, [#allocation3]
    $region5: #{tpu_custom_call.1} parent=1 // pred_fallthru
      _
    // Predicated region
    $region6: #{tpu_custom_call.1} parent=1 // pred_check
      _
    $region7: #{tpu_custom_call.1} parent=1 // pred_check_branch
      %20 = sbr.rel (0) target = $region9
    $region8: #{tpu_custom_call.1} parent=1 // pred_region
      _
    $region9: #{tpu_custom_call.1} parent=1 // pred_fallthru
      _
    // Predicated region
    $region10: #{tpu_custom_call.1} parent=1 // pred_check
      _
    $region11: #{tpu_custom_call.1} parent=1 // pred_check_branch
      %22 = sbr.rel (0) target = $region13
    $region12: #{tpu_custom_call.1} parent=1 // pred_region
      %23 = dma.done [#allocation3], 128
    $region13: #{tpu_custom_call.1} parent=1 // pred_fallthru
      _
    %v24 = vld [vmem:[#allocation2] sm:$0xff]
    %vm25 = vcmask 261120
    %v26 = vsel %vm25, %v24, 0.0
    %27 = vadd.xlane.f32.xlu0 %v26
    %v28 = vpop.xlane.xlu0 %27
    %v29 = vrcp.pop 32.0
    %v30 = vmul.f32 %v28, %v29
    %v31 = vsub.f32 %v24, %v30
    %v32 = vmul.f32 %v31, %v31
    %v33 = vsel %vm25, %v32, 0.0
    %34 = vadd.xlane.f32.xlu0 %v33
    %v35 = vpop.xlane.xlu0 %34
    %v36 = vmul.f32 %v35, 0.032258064
    %v37 = vrsqrt.pop %v36
    %v38 = vmul.f32 %v36, %v37
    %vm39 = vcmp.eq.f32.partialorder %v36, inf
    %v40 = vsel %vm39, %v36, %v38
    %vm41 = vcmp.eq.f32.partialorder %v36, 0.0
    %v42 = vand.u32 %v36, 2147483648
    %v43 = vsel %vm41, %v42, %v40
    %v44 = vadd.f32 %v43, 1e-06
    %v45 = vrcp.pop %v44
    %v46 = vmul.f32 %v44, %v45
    %v47 = vsub.f32 2.0, %v46
    %v48 = vmul.f32 %v45, %v47
    %v49 = vmul.f32 %v31, %v48
    %v50 = vld [vmem:[%s1] sm:$0x1]
    %v52 = vlaneseq
    %v53 = vshrl.u32 %v52, 7
    %v54 = vsub.s32 0, %v53
    %v55 = vrot.slane %v50, %v54
    %v57 = vadd.f32 %v49, %v55
    %58 = vst.msk [vmem:[#allocation5] sm:$0xff] %vm25, %v57
    // Predicated region
    $region14: #{tpu_custom_call.1} parent=1 // pred_check
      _
    $region15: #{tpu_custom_call.1} parent=1 // pred_check_branch
      %60 = sbr.rel (0) target = $region17
    $region16: #{tpu_custom_call.1} parent=1 // pred_region
      %s62 = ssub.s32 128, 128
      %63 = vsyncadd [#allocation4], %s62
      %s65 = sshll.u32 [#allocation5], 4
      %s66 = int_to_ptr.vmem [resolvable:$true] %s65
      %68 = dma.vmem_to_hbm [thread:$0]  %s66, 128, %s2, [#allocation4]
    $region17: #{tpu_custom_call.1} parent=1 // pred_fallthru
      _
    // Predicated region
    $region18: #{tpu_custom_call.1} parent=1 // pred_check
      _
    $region19: #{tpu_custom_call.1} parent=1 // pred_check_branch
      %70 = sbr.rel (0) target = $region21
    $region20: #{tpu_custom_call.1} parent=1 // pred_region
      %71 = dma.done [#allocation4], 128
    $region21: #{tpu_custom_call.1} parent=1 // pred_fallthru
      _
    %72 = vsyncpa [#allocation3], 1
    %73 = vsyncpa [#allocation4], 1

</llo_original>
